<compile_context>
chip_gen: v7x
topology: tpu7x:2x2x1
jax: 0.10.0
libtpu: 0.0.40
codegen_flags: <defaults>
</compile_context>

<pallas_src>
import functools

import jax
import jax.numpy as jnp
from jax import lax
from jax.experimental import pallas as pl
from jax.experimental.pallas import tpu as pltpu


_NEG_BIG = -1e30  # bias for padded classes; exp() underflows to exactly 0 in fp32


def echo_classifier_kernel(x_ref, w_ref, b_ref, o_ref, acc_ref, *, num_frames):
    """Grid = (batch tiles [parallel], frame tiles [arbitrary reduction])."""
    f = pl.program_id(1)

    @pl.when(f == 0)
    def _init():
        acc_ref[...] = jnp.zeros_like(acc_ref)

    # Per-frame L2 normalization: x * rsqrt(max(sum(x^2), eps^2)).
    # rsqrt goes to the EUP slot; no full-width divide on the VALU.
    x = x_ref[...].astype(jnp.float32)                       # (TB, TF, D)
    sumsq = jnp.sum(x * x, axis=-1, keepdims=True)           # (TB, TF, 1)
    inv_norm = lax.rsqrt(jnp.maximum(sumsq, 1e-24))
    xn = x * inv_norm

    # Accumulate the frame-sum of normalized embeddings.
    # (mean over frames commutes with the linear layer, so fc is applied once.)
    acc_ref[...] += jnp.sum(xn, axis=1)                      # (TB, D)

    @pl.when(f == pl.num_programs(1) - 1)
    def _finalize():
        xbar = acc_ref[...] * jnp.float32(1.0 / num_frames)  # (TB, D)
        # Single clean 2D matmul on the MXU, lane-dense (TB, Cpad) output.
        logits = jnp.dot(
            xbar, w_ref[...], preferred_element_type=jnp.float32
        ) + b_ref[...]                                        # (TB, Cpad)
        # Softmax over classes; padded classes have -1e30 bias -> probability 0.
        m = jnp.max(logits, axis=-1, keepdims=True)
        e = jnp.exp(logits - m)
        inv_den = 1.0 / jnp.sum(e, axis=-1, keepdims=True)    # narrow (TB,1) divide
        o_ref[...] = e * inv_den


def echo_classifier(x_emb, w, b, *, batch_tile=8, frame_tile=512):
    """x_emb: [B, F, D] (f32 or bf16), w: [D, C], b: [C] -> probs [B, C] f32."""
    B, F, D = x_emb.shape
    C = w.shape[1]

    # Lane-dense class padding (multiple of 128).
    Cp = ((C + 127) // 128) * 128

    # Batch tiling: pad B up to a multiple of the tile (zero rows are harmless:
    # zero embeddings normalize to zero and are sliced away afterwards).
    tb = batch_tile
    Bp = ((B + tb - 1) // tb) * tb

    # Frame tiling: one block if it fits comfortably, otherwise stream in
    # multiples of 8 frames (zero-padded frames contribute 0 to the accumulator;
    # the mean divides by the true F). Sized for v7x's smaller VMEM.
    if F <= frame_tile:
        tf, Fp = F, F
    else:
        tf = (frame_tile // 8) * 8
        Fp = ((F + tf - 1) // tf) * tf

    # Host-side padding (cheap XLA pads; kernel blocks stay aligned & lane-dense).
    w_pad = jnp.zeros((D, Cp), jnp.float32).at[:, :C].set(w.astype(jnp.float32))
    b_pad = jnp.full((1, Cp), _NEG_BIG, jnp.float32).at[0, :C].set(
        b.astype(jnp.float32))
    if (Bp, Fp) != (B, F):
        x_p = jnp.zeros((Bp, Fp, D), x_emb.dtype).at[:B, :F].set(x_emb)
    else:
        x_p = x_emb

    kernel = functools.partial(echo_classifier_kernel, num_frames=F)

    out_padded = pl.pallas_call(
        kernel,
        out_shape=jax.ShapeDtypeStruct((Bp, Cp), jnp.float32),
        grid_spec=pltpu.PrefetchScalarGridSpec(
            num_scalar_prefetch=0,
            grid=(Bp // tb, Fp // tf),
            in_specs=[
                pl.BlockSpec((tb, tf, D), lambda bi, fi: (bi, fi, 0)),
                pl.BlockSpec((D, Cp), lambda bi, fi: (0, 0)),
                pl.BlockSpec((1, Cp), lambda bi, fi: (0, 0)),
            ],
            out_specs=pl.BlockSpec((tb, Cp), lambda bi, fi: (bi, 0)),
            scratch_shapes=[pltpu.VMEM((tb, D), jnp.float32)],
        ),
        compiler_params=pltpu.CompilerParams(
            dimension_semantics=("parallel", "arbitrary")),
    )(x_p, w_pad, b_pad)

    return out_padded[:B, :C]


def _reference(x_emb, w, b):
    x = x_emb.astype(jnp.float32)
    n = jnp.sqrt(jnp.sum(x * x, axis=-1, keepdims=True))
    xn = x / jnp.maximum(n, 1e-12)
    logits = jnp.einsum("bfd,dc->bfc", xn, w) + b
    m = jnp.mean(logits, axis=1)
    return jax.nn.softmax(m, axis=1)


if __name__ == "__main__":
    B, F, D, C = 2, 8, 512, 2   # 2 videos, 8 frames, 512-d CLIP embeddings, 2 classes

    key = jax.random.PRNGKey(0)
    k_x, k_w, k_b = jax.random.split(key, 3)

    # Synthetic per-frame embeddings (stand-in for echo_clip.encode_image output).
    x_emb = jax.random.normal(k_x, (B, F, D), dtype=jnp.float32)

    # nn.Linear(512, 2) default init: U(-1/sqrt(512), 1/sqrt(512)).
    bound = 1.0 / (D ** 0.5)
    w = jax.random.uniform(k_w, (D, C), jnp.float32, -bound, bound)
    b = jax.random.uniform(k_b, (C,), jnp.float32, -bound, bound)

    out = jax.block_until_ready(echo_classifier(x_emb, w, b))

    ref = _reference(x_emb, w, b)
    assert out.shape == (B, C)
    assert jnp.allclose(out, ref, atol=1e-5, rtol=1e-5), (out, ref)

    print("KERNEL_OK")
</pallas_src>

<mosaic_0001>
module attributes {stable_mosaic.version = 11 : i64} {
  func.func @echo_classifier_kernel(%arg0: i32, %arg1: i32, %arg2: memref<8x8x512xf32, #tpu.memory_space<vmem>>, %arg3: memref<512x128xf32, #tpu.memory_space<vmem>>, %arg4: memref<1x128xf32, #tpu.memory_space<vmem>>, %arg5: memref<8x128xf32, #tpu.memory_space<vmem>>, %arg6: memref<8x512xf32, #tpu.memory_space<vmem>>) attributes {dimension_semantics = [#tpu.dimension_semantics<parallel>, #tpu.dimension_semantics<arbitrary>], iteration_bounds = array<i64: 1, 1>, scalar_prefetch = 0 : i64, scratch_operands = 1 : i64, tpu.core_type = #tpu.core_type<tc>, window_params = [{transform_indices = @transform_0, window_bounds = array<i64: 8, 8, 512>}, {pipeline_mode = #tpu.pipeline_mode<synchronous>, transform_indices = @transform_1, window_bounds = array<i64: 512, 128>}, {pipeline_mode = #tpu.pipeline_mode<synchronous>, transform_indices = @transform_2, window_bounds = array<i64: 1, 128>}, {transform_indices = @transform_3, window_bounds = array<i64: 8, 128>}]} {
    %c0_i32 = arith.constant 0 : i32
    %0 = arith.cmpi eq, %arg1, %c0_i32 : i32
    %1 = arith.extui %0 : i1 to i32
    %c0_i32_0 = arith.constant 0 : i32
    %2 = arith.cmpi ne, %1, %c0_i32_0 : i32
    scf.if %2 {
      %cst_11 = arith.constant 0.000000e+00 : f32
      %19 = vector.broadcast %cst_11 : f32 to vector<8x512xf32>
      %c0_12 = arith.constant 0 : index
      %c0_13 = arith.constant 0 : index
      %20 = vector.load %arg6[%c0_12, %c0_13] : memref<8x512xf32, #tpu.memory_space<vmem>>, vector<8x512xf32>
      tpu.vector_store %arg6[%c0_12, %c0_13], %19 {strides = array<i32>} : memref<8x512xf32, #tpu.memory_space<vmem>>, vector<8x512xf32>,
    } else {
    }
    %c0 = arith.constant 0 : index
    %c0_1 = arith.constant 0 : index
    %c0_2 = arith.constant 0 : index
    %3 = vector.load %arg2[%c0, %c0_1, %c0_2] : memref<8x8x512xf32, #tpu.memory_space<vmem>>, vector<8x8x512xf32>
    %4 = arith.mulf %3, %3 : vector<8x8x512xf32>
    %cst = arith.constant dense<0.000000e+00> : vector<8x8xf32>
    %5 = vector.multi_reduction <add>, %4, %cst [2] : vector<8x8x512xf32> to vector<8x8xf32>
    %6 = vector.shape_cast %5 : vector<8x8xf32> to vector<8x8x1xf32>
    %cst_3 = arith.constant 1.000000e-24 : f32
    %7 = vector.broadcast %cst_3 : f32 to vector<8x8x1xf32>
    %8 = arith.maximumf %6, %7 : vector<8x8x1xf32>
    %9 = math.rsqrt %8 : vector<8x8x1xf32>
    %10 = vector.broadcast %9 : vector<8x8x1xf32> to vector<8x8x512xf32>
    %11 = arith.mulf %3, %10 : vector<8x8x512xf32>
    %c0_4 = arith.constant 0 : index
    %c0_5 = arith.constant 0 : index
    %12 = vector.load %arg6[%c0_4, %c0_5] : memref<8x512xf32, #tpu.memory_space<vmem>>, vector<8x512xf32>
    %cst_6 = arith.constant dense<0.000000e+00> : vector<8x512xf32>
    %13 = vector.multi_reduction <add>, %11, %cst_6 [1] : vector<8x8x512xf32> to vector<8x512xf32>
    %14 = arith.addf %12, %13 : vector<8x512xf32>
    %c0_7 = arith.constant 0 : index
    %c0_8 = arith.constant 0 : index
    %15 = vector.load %arg6[%c0_7, %c0_8] : memref<8x512xf32, #tpu.memory_space<vmem>>, vector<8x512xf32>
    tpu.vector_store %arg6[%c0_7, %c0_8], %14 {strides = array<i32>} : memref<8x512xf32, #tpu.memory_space<vmem>>, vector<8x512xf32>,
    %c0_i32_9 = arith.constant 0 : i32
    %16 = arith.cmpi eq, %arg1, %c0_i32_9 : i32
    %17 = arith.extui %16 : i1 to i32
    %c0_i32_10 = arith.constant 0 : i32
    %18 = arith.cmpi ne, %17, %c0_i32_10 : i32
    scf.if %18 {
      %c0_11 = arith.constant 0 : index
      %c0_12 = arith.constant 0 : index
      %19 = vector.load %arg6[%c0_11, %c0_12] : memref<8x512xf32, #tpu.memory_space<vmem>>, vector<8x512xf32>
      %cst_13 = arith.constant 1.250000e-01 : f32
      %20 = vector.broadcast %cst_13 : f32 to vector<8x512xf32>
      %21 = arith.mulf %19, %20 : vector<8x512xf32>
      %c0_14 = arith.constant 0 : index
      %c0_15 = arith.constant 0 : index
      %22 = vector.load %arg3[%c0_14, %c0_15] : memref<512x128xf32, #tpu.memory_space<vmem>>, vector<512x128xf32>
      %cst_16 = arith.constant dense<0.000000e+00> : vector<8x128xf32>
      %23 = tpu.matmul %21, %22, %cst_16 {dimension_numbers = #tpu.dot_dimension_numbers<[1], [0], [0], [1], [0, 0, 1, 1], [], []>} : vector<8x512xf32>, vector<512x128xf32>, vector<8x128xf32> -> vector<8x128xf32>
      %c0_17 = arith.constant 0 : index
      %c0_18 = arith.constant 0 : index
      %24 = vector.load %arg4[%c0_17, %c0_18] : memref<1x128xf32, #tpu.memory_space<vmem>>, vector<1x128xf32>
      %25 = vector.broadcast %24 : vector<1x128xf32> to vector<8x128xf32>
      %26 = arith.addf %23, %25 : vector<8x128xf32>
      %cst_19 = arith.constant dense<0xFF800000> : vector<8xf32>
      %27 = vector.multi_reduction <maximumf>, %26, %cst_19 [1] : vector<8x128xf32> to vector<8xf32>
      %28 = vector.shape_cast %27 : vector<8xf32> to vector<8x1xf32>
      %29 = vector.broadcast %28 : vector<8x1xf32> to vector<8x128xf32>
      %30 = arith.subf %26, %29 : vector<8x128xf32>
      %31 = math.exp %30 : vector<8x128xf32>
      %cst_20 = arith.constant dense<0.000000e+00> : vector<8xf32>
      %32 = vector.multi_reduction <add>, %31, %cst_20 [1] : vector<8x128xf32> to vector<8xf32>
      %33 = vector.shape_cast %32 : vector<8xf32> to vector<8x1xf32>
      %cst_21 = arith.constant 1.000000e+00 : f32
      %34 = vector.broadcast %cst_21 : f32 to vector<8x1xf32>
      %35 = arith.divf %34, %33 : vector<8x1xf32>
      %36 = vector.broadcast %35 : vector<8x1xf32> to vector<8x128xf32>
      %37 = arith.mulf %31, %36 : vector<8x128xf32>
      %c0_22 = arith.constant 0 : index
      %c0_23 = arith.constant 0 : index
      %38 = vector.load %arg5[%c0_22, %c0_23] : memref<8x128xf32, #tpu.memory_space<vmem>>, vector<8x128xf32>
      tpu.vector_store %arg5[%c0_22, %c0_23], %37 {strides = array<i32>} : memref<8x128xf32, #tpu.memory_space<vmem>>, vector<8x128xf32>,
    } else {
    }
    return
  }
  func.func @transform_0(%arg0: i32, %arg1: i32) -> (i32, i32, i32) {
    %c0_i32 = arith.constant 0 : i32
    %c0_i32_0 = arith.constant 0 : i32
    return %arg0, %arg1, %c0_i32 : i32, i32, i32
  }
  func.func @transform_1(%arg0: i32, %arg1: i32) -> (i32, i32) {
    %c0_i32 = arith.constant 0 : i32
    %c0_i32_0 = arith.constant 0 : i32
    %c0_i32_1 = arith.constant 0 : i32
    return %c0_i32, %c0_i32_0 : i32, i32
  }
  func.func @transform_2(%arg0: i32, %arg1: i32) -> (i32, i32) {
    %c0_i32 = arith.constant 0 : i32
    %c0_i32_0 = arith.constant 0 : i32
    %c0_i32_1 = arith.constant 0 : i32
    return %c0_i32, %c0_i32_0 : i32, i32
  }
  func.func @transform_3(%arg0: i32, %arg1: i32) -> (i32, i32) {
    %c0_i32 = arith.constant 0 : i32
    %c0_i32_0 = arith.constant 0 : i32
    return %arg0, %c0_i32 : i32, i32
  }
}

</mosaic_0001>

<llo_original>
// kernel: tpu_custom_call.1
$region0: #{tpu_custom_call.1}
  #allocation0 [shape = 'u32[]', space=smem, size = 0x4, offset = 0x4, fixed_abs, tag = 'smem constant byte address 0x4 - core index']
  #allocation1 [shape = 'u32[144,128]{1,0:T(1,128)}', space=vmem, size = 0x12000, scoped, tag = 'internal scratch']
  #allocation2 [shape = 'f32[8,512]{1,0:T(8,128)}', space=vmem, size = 0x4000, scoped, tag = 'scratch operand']
  %s0 = inlined_call_operand.hbm [shape: f32[8,8,512], index: 0, kind: input, shape index: {}]
  %s1 = inlined_call_operand.hbm [shape: f32[512,128], index: 1, kind: input, shape index: {}]
  %s2 = inlined_call_operand.vmem [shape: f32[1,128], index: 2, kind: input, shape index: {}]
  %s3 = inlined_call_operand.hbm [shape: f32[8,128], index: 3, kind: output, shape index: {}]
  %s4 = sld [smem:[#allocation0]]
  $region38: #{tpu_custom_call.1} parent=0
    _
  %s6 = ssub.s32 1, %s4
  %s7 = scalar_select 0, %s6, %s4
  $region1: #{tpu_custom_call.1} parent=0
    #allocation3 [shape = 'u8[131072]{0}', space=vmem, size = 0x20000, scoped, tag = 'input window, operand 0, single buffered']
    #allocation4 [shape = 's32[1]{0}', space=sflag, size = 0x4, scoped, tag = 'scoped memory for tpu_custom_call.1']
    #allocation5 [shape = 's32[1]{0}', space=sflag, size = 0x4, scoped, tag = 'scoped memory for tpu_custom_call.1']
    #allocation6 [shape = 'u8[262144]{0}', space=vmem, size = 0x40000, scoped, tag = 'input window, operand 1, single buffered']
    #allocation7 [shape = 's32[1]{0}', space=sflag, size = 0x4, scoped, tag = 'scoped memory for tpu_custom_call.1']
    #allocation8 [shape = 'u8[4096]{0}', space=vmem, size = 0x1000, scoped, tag = 'output window, operand 0, single buffered']
    %8 = vsyncpa [#allocation4], 0
    %9 = vsyncpa [#allocation7], 0
    %10 = vsyncpa [#allocation5], 0
    // Predicated region
    $region2: #{tpu_custom_call.1} parent=1 // pred_check
      _
    $region3: #{tpu_custom_call.1} parent=1 // pred_check_branch
      %12 = sbr.rel (0) target = $region5
    $region4: #{tpu_custom_call.1} parent=1 // pred_region
      %s14 = ssub.s32 4096, 4096
      %15 = vsyncadd [#allocation4], %s14
      %s16 = sshll.u32 [#allocation3], 4
      %s17 = int_to_ptr.vmem [resolvable:$true] %s16
      %22 = dma.hbm_to_vmem [thread:$0]  %s0, 4096, %s17, [#allocation4], 512, 512, 32
    $region5: #{tpu_custom_call.1} parent=1 // pred_fallthru
      _
    // Predicated region
    $region6: #{tpu_custom_call.1} parent=1 // pred_check
      _
    $region7: #{tpu_custom_call.1} parent=1 // pred_check_branch
      %24 = sbr.rel (0) target = $region9
    $region8: #{tpu_custom_call.1} parent=1 // pred_region
      %s26 = ssub.s32 8192, 8192
      %27 = vsyncadd [#allocation7], %s26
      %s28 = sshll.u32 [#allocation6], 4
      %s29 = int_to_ptr.vmem [resolvable:$true] %s28
      %34 = dma.hbm_to_vmem [thread:$0]  %s1, 8192, %s29, [#allocation7], 128, 128, 8
    $region9: #{tpu_custom_call.1} parent=1 // pred_fallthru
      _
    // Predicated region
    $region10: #{tpu_custom_call.1} parent=1 // pred_check
      _
    $region11: #{tpu_custom_call.1} parent=1 // pred_check_branch
      %36 = sbr.rel (0) target = $region13
    $region12: #{tpu_custom_call.1} parent=1 // pred_region
      _
    $region13: #{tpu_custom_call.1} parent=1 // pred_fallthru
      _
    // Predicated region
    $region14: #{tpu_custom_call.1} parent=1 // pred_check
      _
    $region15: #{tpu_custom_call.1} parent=1 // pred_check_branch
      %38 = sbr.rel (0) target = $region17
    $region16: #{tpu_custom_call.1} parent=1 // pred_region
      %39 = dma.done [#allocation4], 4096
    $region17: #{tpu_custom_call.1} parent=1 // pred_fallthru
      _
    // Predicated region
    $region18: #{tpu_custom_call.1} parent=1 // pred_check
      _
    $region19: #{tpu_custom_call.1} parent=1 // pred_check_branch
      %41 = sbr.rel (0) target = $region21
    $region20: #{tpu_custom_call.1} parent=1 // pred_region
      %42 = dma.done [#allocation7], 8192
    $region21: #{tpu_custom_call.1} parent=1 // pred_fallthru
      _
    %p43 = scmp.eq.s32.totalorder 0, 0
    // Predicated region
    $region22: #{tpu_custom_call.1} parent=1 // pred_check
      %p44 = pneg %p43
    $region23: #{tpu_custom_call.1} parent=1 // pred_check_branch
      %46 = sbr.rel (%p44) target = $region25
    $region24: #{tpu_custom_call.1} parent=1 // pred_region
      %47 = vst [vmem:[#allocation2] sm:$0xff] 0.0
      %48 = vst [vmem:[#allocation2 + $0x8] sm:$0xff] 0.0
      %49 = vst [vmem:[#allocation2 + $0x10] sm:$0xff] 0.0
      %50 = vst [vmem:[#allocation2 + $0x18] sm:$0xff] 0.0
    $region25: #{tpu_custom_call.1} parent=1 // pred_fallthru
      _
    %v51 = vld [vmem:[#allocation3] sm:$0xff]
    %v52 = vld [vmem:[#allocation3 + $0x8] sm:$0xff]
    %v53 = vld [vmem:[#allocation3 + $0x10] sm:$0xff]
    %v54 = vld [vmem:[#allocation3 + $0x18] sm:$0xff]
    %v55 = vld [vmem:[#allocation3 + $0x20] sm:$0xff]
    %v56 = vld [vmem:[#allocation3 + $0x28] sm:$0xff]
    %v57 = vld [vmem:[#allocation3 + $0x30] sm:$0xff]
    %v58 = vld [vmem:[#allocation3 + $0x38] sm:$0xff]
    %v59 = vld [vmem:[#allocation3 + $0x40] sm:$0xff]
    %v60 = vld [vmem:[#allocation3 + $0x48] sm:$0xff]
    %v61 = vld [vmem:[#allocation3 + $0x50] sm:$0xff]
    %v62 = vld [vmem:[#allocation3 + $0x58] sm:$0xff]
    %v63 = vld [vmem:[#allocation3 + $0x60] sm:$0xff]
    %v64 = vld [vmem:[#allocation3 + $0x68] sm:$0xff]
    %v65 = vld [vmem:[#allocation3 + $0x70] sm:$0xff]
    %v66 = vld [vmem:[#allocation3 + $0x78] sm:$0xff]
    %v67 = vld [vmem:[#allocation3 + $0x80] sm:$0xff]
    %v68 = vld [vmem:[#allocation3 + $0x88] sm:$0xff]
    %v69 = vld [vmem:[#allocation3 + $0x90] sm:$0xff]
    %v70 = vld [vmem:[#allocation3 + $0x98] sm:$0xff]
    %v71 = vld [vmem:[#allocation3 + $0xa0] sm:$0xff]
    %v72 = vld [vmem:[#allocation3 + $0xa8] sm:$0xff]
    %v73 = vld [vmem:[#allocation3 + $0xb0] sm:$0xff]
    %v74 = vld [vmem:[#allocation3 + $0xb8] sm:$0xff]
    %v75 = vld [vmem:[#allocation3 + $0xc0] sm:$0xff]
    %v76 = vld [vmem:[#allocation3 + $0xc8] sm:$0xff]
    %v77 = vld [vmem:[#allocation3 + $0xd0] sm:$0xff]
    %v78 = vld [vmem:[#allocation3 + $0xd8] sm:$0xff]
    %v79 = vld [vmem:[#allocation3 + $0xe0] sm:$0xff]
    %v80 = vld [vmem:[#allocation3 + $0xe8] sm:$0xff]
    %v81 = vld [vmem:[#allocation3 + $0xf0] sm:$0xff]
    %v82 = vld [vmem:[#allocation3 + $0xf8] sm:$0xff]
    %v83 = vmul.f32 %v51, %v51
    %v84 = vmul.f32 %v52, %v52
    %v85 = vmul.f32 %v53, %v53
    %v86 = vmul.f32 %v54, %v54
    %v87 = vmul.f32 %v55, %v55
    %v88 = vmul.f32 %v56, %v56
    %v89 = vmul.f32 %v57, %v57
    %v90 = vmul.f32 %v58, %v58
    %v91 = vmul.f32 %v59, %v59
    %v92 = vmul.f32 %v60, %v60
    %v93 = vmul.f32 %v61, %v61
    %v94 = vmul.f32 %v62, %v62
    %v95 = vmul.f32 %v63, %v63
    %v96 = vmul.f32 %v64, %v64
    %v97 = vmul.f32 %v65, %v65
    %v98 = vmul.f32 %v66, %v66
    %v99 = vmul.f32 %v67, %v67
    %v100 = vmul.f32 %v68, %v68
    %v101 = vmul.f32 %v69, %v69
    %v102 = vmul.f32 %v70, %v70
    %v103 = vmul.f32 %v71, %v71
    %v104 = vmul.f32 %v72, %v72
    %v105 = vmul.f32 %v73, %v73
    %v106 = vmul.f32 %v74, %v74
    %v107 = vmul.f32 %v75, %v75
    %v108 = vmul.f32 %v76, %v76
    %v109 = vmul.f32 %v77, %v77
    %v110 = vmul.f32 %v78, %v78
    %v111 = vmul.f32 %v79, %v79
    %v112 = vmul.f32 %v80, %v80
    %v113 = vmul.f32 %v81, %v81
    %v114 = vmul.f32 %v82, %v82
    %v115 = vadd.f32 %v83, %v84
    %v116 = vadd.f32 %v115, %v85
    %v117 = vadd.f32 %v116, %v86
    %118 = vadd.xlane.f32.xlu0 %v117
    %v119 = vpop.xlane.xlu0 %118
    %v120 = vadd.f32 %v87, %v88
    %v121 = vadd.f32 %v120, %v89
    %v122 = vadd.f32 %v121, %v90
    %123 = vadd.xlane.f32.xlu0 %v122
    %v124 = vpop.xlane.xlu0 %123
    %v125 = vadd.f32 %v91, %v92
    %v126 = vadd.f32 %v125, %v93
    %v127 = vadd.f32 %v126, %v94
    %128 = vadd.xlane.f32.xlu0 %v127
    %v129 = vpop.xlane.xlu0 %128
    %v130 = vadd.f32 %v95, %v96
    %v131 = vadd.f32 %v130, %v97
    %v132 = vadd.f32 %v131, %v98
    %133 = vadd.xlane.f32.xlu0 %v132
    %v134 = vpop.xlane.xlu0 %133
    %v135 = vadd.f32 %v99, %v100
    %v136 = vadd.f32 %v135, %v101
    %v137 = vadd.f32 %v136, %v102
    %138 = vadd.xlane.f32.xlu0 %v137
    %v139 = vpop.xlane.xlu0 %138
    %v140 = vadd.f32 %v103, %v104
    %v141 = vadd.f32 %v140, %v105
    %v142 = vadd.f32 %v141, %v106
    %143 = vadd.xlane.f32.xlu0 %v142
    %v144 = vpop.xlane.xlu0 %143
    %v145 = vadd.f32 %v107, %v108
    %v146 = vadd.f32 %v145, %v109
    %v147 = vadd.f32 %v146, %v110
    %148 = vadd.xlane.f32.xlu0 %v147
    %v149 = vpop.xlane.xlu0 %148
    %v150 = vadd.f32 %v111, %v112
    %v151 = vadd.f32 %v150, %v113
    %v152 = vadd.f32 %v151, %v114
    %153 = vadd.xlane.f32.xlu0 %v152
    %v154 = vpop.xlane.xlu0 %153
    %v155 = vmax.f32 %v119, 1e-24
    %v156 = vmax.f32 %v124, 1e-24
    %v157 = vmax.f32 %v129, 1e-24
    %v158 = vmax.f32 %v134, 1e-24
    %v159 = vmax.f32 %v139, 1e-24
    %v160 = vmax.f32 %v144, 1e-24
    %v161 = vmax.f32 %v149, 1e-24
    %v162 = vmax.f32 %v154, 1e-24
    %v163 = vrsqrt.pop %v155
    %v164 = vrsqrt.pop %v156
    %v165 = vrsqrt.pop %v157
    %v166 = vrsqrt.pop %v158
    %v167 = vrsqrt.pop %v159
    %v168 = vrsqrt.pop %v160
    %v169 = vrsqrt.pop %v161
    %v170 = vrsqrt.pop %v162
    %v171 = vmul.f32 %v51, %v163
    %v172 = vmul.f32 %v52, %v163
    %v173 = vmul.f32 %v53, %v163
    %v174 = vmul.f32 %v54, %v163
    %v175 = vmul.f32 %v55, %v164
    %v176 = vmul.f32 %v56, %v164
    %v177 = vmul.f32 %v57, %v164
    %v178 = vmul.f32 %v58, %v164
    %v179 = vmul.f32 %v59, %v165
    %v180 = vmul.f32 %v60, %v165
    %v181 = vmul.f32 %v61, %v165
    %v182 = vmul.f32 %v62, %v165
    %v183 = vmul.f32 %v63, %v166
    %v184 = vmul.f32 %v64, %v166
    %v185 = vmul.f32 %v65, %v166
    %v186 = vmul.f32 %v66, %v166
    %v187 = vmul.f32 %v67, %v167
    %v188 = vmul.f32 %v68, %v167
    %v189 = vmul.f32 %v69, %v167
    %v190 = vmul.f32 %v70, %v167
    %v191 = vmul.f32 %v71, %v168
    %v192 = vmul.f32 %v72, %v168
    %v193 = vmul.f32 %v73, %v168
    %v194 = vmul.f32 %v74, %v168
    %v195 = vmul.f32 %v75, %v169
    %v196 = vmul.f32 %v76, %v169
    %v197 = vmul.f32 %v77, %v169
    %v198 = vmul.f32 %v78, %v169
    %v199 = vmul.f32 %v79, %v170
    %v200 = vmul.f32 %v80, %v170
    %v201 = vmul.f32 %v81, %v170
    %v202 = vmul.f32 %v82, %v170
    %v203 = vld [vmem:[#allocation2] sm:$0xff]
    %v204 = vld [vmem:[#allocation2 + $0x8] sm:$0xff]
    %v205 = vld [vmem:[#allocation2 + $0x10] sm:$0xff]
    %v206 = vld [vmem:[#allocation2 + $0x18] sm:$0xff]
    %v207 = vrot.slane %v171, 4
    %v208 = vadd.f32 %v171, %v207
    %v209 = vrot.slane %v208, 2
    %v210 = vadd.f32 %v208, %v209
    %v211 = vrot.slane %v210, 1
    %v212 = vadd.f32 %v210, %v211
    %v213 = vrot.slane %v172, 4
    %v214 = vadd.f32 %v172, %v213
    %v215 = vrot.slane %v214, 2
    %v216 = vadd.f32 %v214, %v215
    %v217 = vrot.slane %v216, 1
    %v218 = vadd.f32 %v216, %v217
    %v219 = vrot.slane %v173, 4
    %v220 = vadd.f32 %v173, %v219
    %v221 = vrot.slane %v220, 2
    %v222 = vadd.f32 %v220, %v221
    %v223 = vrot.slane %v222, 1
    %v224 = vadd.f32 %v222, %v223
    %v225 = vrot.slane %v174, 4
    %v226 = vadd.f32 %v174, %v225
    %v227 = vrot.slane %v226, 2
    %v228 = vadd.f32 %v226, %v227
    %v229 = vrot.slane %v228, 1
    %v230 = vadd.f32 %v228, %v229
    %v231 = vrot.slane %v175, 4
    %v232 = vadd.f32 %v175, %v231
    %v233 = vrot.slane %v232, 2
    %v234 = vadd.f32 %v232, %v233
    %v235 = vrot.slane %v234, 1
    %v236 = vadd.f32 %v234, %v235
    %v237 = vrot.slane %v176, 4
    %v238 = vadd.f32 %v176, %v237
    %v239 = vrot.slane %v238, 2
    %v240 = vadd.f32 %v238, %v239
    %v241 = vrot.slane %v240, 1
    %v242 = vadd.f32 %v240, %v241
    %v243 = vrot.slane %v177, 4
    %v244 = vadd.f32 %v177, %v243
    %v245 = vrot.slane %v244, 2
    %v246 = vadd.f32 %v244, %v245
    %v247 = vrot.slane %v246, 1
    %v248 = vadd.f32 %v246, %v247
    %v249 = vrot.slane %v178, 4
    %v250 = vadd.f32 %v178, %v249
    %v251 = vrot.slane %v250, 2
    %v252 = vadd.f32 %v250, %v251
    %v253 = vrot.slane %v252, 1
    %v254 = vadd.f32 %v252, %v253
    %v255 = vrot.slane %v179, 4
    %v256 = vadd.f32 %v179, %v255
    %v257 = vrot.slane %v256, 2
    %v258 = vadd.f32 %v256, %v257
    %v259 = vrot.slane %v258, 1
    %v260 = vadd.f32 %v258, %v259
    %v261 = vrot.slane %v180, 4
    %v262 = vadd.f32 %v180, %v261
    %v263 = vrot.slane %v262, 2
    %v264 = vadd.f32 %v262, %v263
    %v265 = vrot.slane %v264, 1
    %v266 = vadd.f32 %v264, %v265
    %v267 = vrot.slane %v181, 4
    %v268 = vadd.f32 %v181, %v267
    %v269 = vrot.slane %v268, 2
    %v270 = vadd.f32 %v268, %v269
    %v271 = vrot.slane %v270, 1
    %v272 = vadd.f32 %v270, %v271
    %v273 = vrot.slane %v182, 4
    %v274 = vadd.f32 %v182, %v273
    %v275 = vrot.slane %v274, 2
    %v276 = vadd.f32 %v274, %v275
    %v277 = vrot.slane %v276, 1
    %v278 = vadd.f32 %v276, %v277
    %v279 = vrot.slane %v183, 4
    %v280 = vadd.f32 %v183, %v279
    %v281 = vrot.slane %v280, 2
    %v282 = vadd.f32 %v280, %v281
    %v283 = vrot.slane %v282, 1
    %v284 = vadd.f32 %v282, %v283
    %v285 = vrot.slane %v184, 4
    %v286 = vadd.f32 %v184, %v285
    %v287 = vrot.slane %v286, 2
    %v288 = vadd.f32 %v286, %v287
    %v289 = vrot.slane %v288, 1
    %v290 = vadd.f32 %v288, %v289
    %v291 = vrot.slane %v185, 4
    %v292 = vadd.f32 %v185, %v291
    %v293 = vrot.slane %v292, 2
    %v294 = vadd.f32 %v292, %v293
    %v295 = vrot.slane %v294, 1
    %v296 = vadd.f32 %v294, %v295
    %v297 = vrot.slane %v186, 4
    %v298 = vadd.f32 %v186, %v297
    %v299 = vrot.slane %v298, 2
    %v300 = vadd.f32 %v298, %v299
    %v301 = vrot.slane %v300, 1
    %v302 = vadd.f32 %v300, %v301
    %v303 = vrot.slane %v187, 4
    %v304 = vadd.f32 %v187, %v303
    %v305 = vrot.slane %v304, 2
    %v306 = vadd.f32 %v304, %v305
    %v307 = vrot.slane %v306, 1
    %v308 = vadd.f32 %v306, %v307
    %v309 = vrot.slane %v188, 4
    %v310 = vadd.f32 %v188, %v309
    %v311 = vrot.slane %v310, 2
    %v312 = vadd.f32 %v310, %v311
    %v313 = vrot.slane %v312, 1
    %v314 = vadd.f32 %v312, %v313
    %v315 = vrot.slane %v189, 4
    %v316 = vadd.f32 %v189, %v315
    %v317 = vrot.slane %v316, 2
    %v318 = vadd.f32 %v316, %v317
    %v319 = vrot.slane %v318, 1
    %v320 = vadd.f32 %v318, %v319
    %v321 = vrot.slane %v190, 4
    %v322 = vadd.f32 %v190, %v321
    %v323 = vrot.slane %v322, 2
    %v324 = vadd.f32 %v322, %v323
    %v325 = vrot.slane %v324, 1
    %v326 = vadd.f32 %v324, %v325
    %v327 = vrot.slane %v191, 4
    %v328 = vadd.f32 %v191, %v327
    %v329 = vrot.slane %v328, 2
    %v330 = vadd.f32 %v328, %v329
    %v331 = vrot.slane %v330, 1
    %v332 = vadd.f32 %v330, %v331
    %v333 = vrot.slane %v192, 4
    %v334 = vadd.f32 %v192, %v333
    %v335 = vrot.slane %v334, 2
    %v336 = vadd.f32 %v334, %v335
    %v337 = vrot.slane %v336, 1
    %v338 = vadd.f32 %v336, %v337
    %v339 = vrot.slane %v193, 4
    %v340 = vadd.f32 %v193, %v339
    %v341 = vrot.slane %v340, 2
    %v342 = vadd.f32 %v340, %v341
    %v343 = vrot.slane %v342, 1
    %v344 = vadd.f32 %v342, %v343
    %v345 = vrot.slane %v194, 4
    %v346 = vadd.f32 %v194, %v345
    %v347 = vrot.slane %v346, 2
    %v348 = vadd.f32 %v346, %v347
    %v349 = vrot.slane %v348, 1
    %v350 = vadd.f32 %v348, %v349
    %v351 = vrot.slane %v195, 4
    %v352 = vadd.f32 %v195, %v351
    %v353 = vrot.slane %v352, 2
    %v354 = vadd.f32 %v352, %v353
    %v355 = vrot.slane %v354, 1
    %v356 = vadd.f32 %v354, %v355
    %v357 = vrot.slane %v196, 4
    %v358 = vadd.f32 %v196, %v357
    %v359 = vrot.slane %v358, 2
    %v360 = vadd.f32 %v358, %v359
    %v361 = vrot.slane %v360, 1
    %v362 = vadd.f32 %v360, %v361
    %v363 = vrot.slane %v197, 4
    %v364 = vadd.f32 %v197, %v363
    %v365 = vrot.slane %v364, 2
    %v366 = vadd.f32 %v364, %v365
    %v367 = vrot.slane %v366, 1
    %v368 = vadd.f32 %v366, %v367
    %v369 = vrot.slane %v198, 4
    %v370 = vadd.f32 %v198, %v369
    %v371 = vrot.slane %v370, 2
    %v372 = vadd.f32 %v370, %v371
    %v373 = vrot.slane %v372, 1
    %v374 = vadd.f32 %v372, %v373
    %v375 = vrot.slane %v199, 4
    %v376 = vadd.f32 %v199, %v375
    %v377 = vrot.slane %v376, 2
    %v378 = vadd.f32 %v376, %v377
    %v379 = vrot.slane %v378, 1
    %v380 = vadd.f32 %v378, %v379
    %v381 = vrot.slane %v200, 4
    %v382 = vadd.f32 %v200, %v381
    %v383 = vrot.slane %v382, 2
    %v384 = vadd.f32 %v382, %v383
    %v385 = vrot.slane %v384, 1
    %v386 = vadd.f32 %v384, %v385
    %v387 = vrot.slane %v201, 4
    %v388 = vadd.f32 %v201, %v387
    %v389 = vrot.slane %v388, 2
    %v390 = vadd.f32 %v388, %v389
    %v391 = vrot.slane %v390, 1
    %v392 = vadd.f32 %v390, %v391
    %v393 = vrot.slane %v202, 4
    %v394 = vadd.f32 %v202, %v393
    %v395 = vrot.slane %v394, 2
    %v396 = vadd.f32 %v394, %v395
    %v397 = vrot.slane %v396, 1
    %v398 = vadd.f32 %v396, %v397
    %vm431 = vcmask 1041409
    %v432 = vsel %vm431, %v236, %v212
    %vm433 = vcmask 1042434
    %v434 = vsel %vm433, %v260, %v432
    %vm435 = vcmask 1043459
    %v436 = vsel %vm435, %v284, %v434
    %vm437 = vcmask 1044484
    %v438 = vsel %vm437, %v308, %v436
    %vm439 = vcmask 1045509
    %v440 = vsel %vm439, %v332, %v438
    %vm441 = vcmask 1046534
    %v442 = vsel %vm441, %v356, %v440
    %vm443 = vcmask 1047559
    %v444 = vsel %vm443, %v380, %v442
    %v445 = vsel %vm431, %v242, %v218
    %v446 = vsel %vm433, %v266, %v445
    %v447 = vsel %vm435, %v290, %v446
    %v448 = vsel %vm437, %v314, %v447
    %v449 = vsel %vm439, %v338, %v448
    %v450 = vsel %vm441, %v362, %v449
    %v451 = vsel %vm443, %v386, %v450
    %v452 = vsel %vm431, %v248, %v224
    %v453 = vsel %vm433, %v272, %v452
    %v454 = vsel %vm435, %v296, %v453
    %v455 = vsel %vm437, %v320, %v454
    %v456 = vsel %vm439, %v344, %v455
    %v457 = vsel %vm441, %v368, %v456
    %v458 = vsel %vm443, %v392, %v457
    %v459 = vsel %vm431, %v254, %v230
    %v460 = vsel %vm433, %v278, %v459
    %v461 = vsel %vm435, %v302, %v460
    %v462 = vsel %vm437, %v326, %v461
    %v463 = vsel %vm439, %v350, %v462
    %v464 = vsel %vm441, %v374, %v463
    %v465 = vsel %vm443, %v398, %v464
    %v470 = vadd.f32 %v203, %v444
    %v471 = vadd.f32 %v204, %v451
    %v472 = vadd.f32 %v205, %v458
    %v473 = vadd.f32 %v206, %v465
    %474 = vst [vmem:[#allocation2] sm:$0xff] %v470
    %475 = vst [vmem:[#allocation2 + $0x8] sm:$0xff] %v471
    %476 = vst [vmem:[#allocation2 + $0x10] sm:$0xff] %v472
    %477 = vst [vmem:[#allocation2 + $0x18] sm:$0xff] %v473
    // Predicated region
    $region26: #{tpu_custom_call.1} parent=1 // pred_check
      %p478 = pneg %p43
    $region27: #{tpu_custom_call.1} parent=1 // pred_check_branch
      %480 = sbr.rel (%p478) target = $region29
    $region28: #{tpu_custom_call.1} parent=1 // pred_region
      %v481 = vld [vmem:[#allocation2] sm:$0xff]
      %v482 = vld [vmem:[#allocation2 + $0x8] sm:$0xff]
      %v483 = vld [vmem:[#allocation2 + $0x10] sm:$0xff]
      %v484 = vld [vmem:[#allocation2 + $0x18] sm:$0xff]
      %v485 = vmul.f32 %v481, 0.125
      %v486 = vmul.f32 %v482, 0.125
      %v487 = vmul.f32 %v483, 0.125
      %v488 = vmul.f32 %v484, 0.125
      %v489 = vld [vmem:[#allocation6] sm:$0xff]
      %v490 = vld [vmem:[#allocation6 + $0x8] sm:$0xff]
      %v491 = vld [vmem:[#allocation6 + $0x10] sm:$0xff]
      %v492 = vld [vmem:[#allocation6 + $0x18] sm:$0xff]
      %v493 = vld [vmem:[#allocation6 + $0x20] sm:$0xff]
      %v494 = vld [vmem:[#allocation6 + $0x28] sm:$0xff]
      %v495 = vld [vmem:[#allocation6 + $0x30] sm:$0xff]
      %v496 = vld [vmem:[#allocation6 + $0x38] sm:$0xff]
      %v497 = vld [vmem:[#allocation6 + $0x40] sm:$0xff]
      %v498 = vld [vmem:[#allocation6 + $0x48] sm:$0xff]
      %v499 = vld [vmem:[#allocation6 + $0x50] sm:$0xff]
      %v500 = vld [vmem:[#allocation6 + $0x58] sm:$0xff]
      %v501 = vld [vmem:[#allocation6 + $0x60] sm:$0xff]
      %v502 = vld [vmem:[#allocation6 + $0x68] sm:$0xff]
      %v503 = vld [vmem:[#allocation6 + $0x70] sm:$0xff]
      %v504 = vld [vmem:[#allocation6 + $0x78] sm:$0xff]
      %v505 = vld [vmem:[#allocation6 + $0x80] sm:$0xff]
      %v506 = vld [vmem:[#allocation6 + $0x88] sm:$0xff]
      %v507 = vld [vmem:[#allocation6 + $0x90] sm:$0xff]
      %v508 = vld [vmem:[#allocation6 + $0x98] sm:$0xff]
      %v509 = vld [vmem:[#allocation6 + $0xa0] sm:$0xff]
      %v510 = vld [vmem:[#allocation6 + $0xa8] sm:$0xff]
      %v511 = vld [vmem:[#allocation6 + $0xb0] sm:$0xff]
      %v512 = vld [vmem:[#allocation6 + $0xb8] sm:$0xff]
      %v513 = vld [vmem:[#allocation6 + $0xc0] sm:$0xff]
      %v514 = vld [vmem:[#allocation6 + $0xc8] sm:$0xff]
      %v515 = vld [vmem:[#allocation6 + $0xd0] sm:$0xff]
      %v516 = vld [vmem:[#allocation6 + $0xd8] sm:$0xff]
      %v517 = vld [vmem:[#allocation6 + $0xe0] sm:$0xff]
      %v518 = vld [vmem:[#allocation6 + $0xe8] sm:$0xff]
      %v519 = vld [vmem:[#allocation6 + $0xf0] sm:$0xff]
      %v520 = vld [vmem:[#allocation6 + $0xf8] sm:$0xff]
      %v521 = vld [vmem:[#allocation6 + $0x100] sm:$0xff]
      %v522 = vld [vmem:[#allocation6 + $0x108] sm:$0xff]
      %v523 = vld [vmem:[#allocation6 + $0x110] sm:$0xff]
      %v524 = vld [vmem:[#allocation6 + $0x118] sm:$0xff]
      %v525 = vld [vmem:[#allocation6 + $0x120] sm:$0xff]
      %v526 = vld [vmem:[#allocation6 + $0x128] sm:$0xff]
      %v527 = vld [vmem:[#allocation6 + $0x130] sm:$0xff]
      %v528 = vld [vmem:[#allocation6 + $0x138] sm:$0xff]
      %v529 = vld [vmem:[#allocation6 + $0x140] sm:$0xff]
      %v530 = vld [vmem:[#allocation6 + $0x148] sm:$0xff]
      %v531 = vld [vmem:[#allocation6 + $0x150] sm:$0xff]
      %v532 = vld [vmem:[#allocation6 + $0x158] sm:$0xff]
      %v533 = vld [vmem:[#allocation6 + $0x160] sm:$0xff]
      %v534 = vld [vmem:[#allocation6 + $0x168] sm:$0xff]
      %v535 = vld [vmem:[#allocation6 + $0x170] sm:$0xff]
      %v536 = vld [vmem:[#allocation6 + $0x178] sm:$0xff]
      %v537 = vld [vmem:[#allocation6 + $0x180] sm:$0xff]
      %v538 = vld [vmem:[#allocation6 + $0x188] sm:$0xff]
      %v539 = vld [vmem:[#allocation6 + $0x190] sm:$0xff]
      %v540 = vld [vmem:[#allocation6 + $0x198] sm:$0xff]
      %v541 = vld [vmem:[#allocation6 + $0x1a0] sm:$0xff]
      %v542 = vld [vmem:[#allocation6 + $0x1a8] sm:$0xff]
      %v543 = vld [vmem:[#allocation6 + $0x1b0] sm:$0xff]
      %v544 = vld [vmem:[#allocation6 + $0x1b8] sm:$0xff]
      %v545 = vld [vmem:[#allocation6 + $0x1c0] sm:$0xff]
      %v546 = vld [vmem:[#allocation6 + $0x1c8] sm:$0xff]
      %v547 = vld [vmem:[#allocation6 + $0x1d0] sm:$0xff]
      %v548 = vld [vmem:[#allocation6 + $0x1d8] sm:$0xff]
      %v549 = vld [vmem:[#allocation6 + $0x1e0] sm:$0xff]
      %v550 = vld [vmem:[#allocation6 + $0x1e8] sm:$0xff]
      %v551 = vld [vmem:[#allocation6 + $0x1f0] sm:$0xff]
      %v552 = vld [vmem:[#allocation6 + $0x1f8] sm:$0xff]
      %v553 = vld [vmem:[%s2] sm:$0x1]
      %v555 = vlaneseq
      %v556 = vshrl.u32 %v555, 7
      %v557 = vsub.s32 0, %v556
      %v558 = vrot.slane %v553, %v557
      %560 = vmatprep.subr.mxu0 0.0
      %561 = vmatpush1.msra.mxu0 %v489
      %562 = vmatprep.subr.mxu0 0.0
      %563 = vmatpush1.msra.mxu0 %v490
      %564 = vmatprep.subr.mxu0 0.0
      %565 = vmatpush1.msra.mxu0 %v491
      %566 = vmatprep.subr.mxu0 0.0
      %567 = vmatpush1.msra.mxu0 %v492
      %568 = vmatprep.subr.mxu0 0.0
      %569 = vmatpush1.msra.mxu0 %v493
      %570 = vmatprep.subr.mxu0 0.0
      %571 = vmatpush1.msra.mxu0 %v494
      %572 = vmatprep.subr.mxu0 0.0
      %573 = vmatpush1.msra.mxu0 %v495
      %574 = vmatprep.subr.mxu0 0.0
      %575 = vmatpush1.msra.mxu0 %v496
      %576 = vmatprep.subr.mxu0 0.0
      %577 = vmatpush1.msra.mxu0 %v497
      %578 = vmatprep.subr.mxu0 0.0
      %579 = vmatpush1.msra.mxu0 %v498
      %580 = vmatprep.subr.mxu0 0.0
      %581 = vmatpush1.msra.mxu0 %v499
      %582 = vmatprep.subr.mxu0 0.0
      %583 = vmatpush1.msra.mxu0 %v500
      %584 = vmatprep.subr.mxu0 0.0
      %585 = vmatpush1.msra.mxu0 %v501
      %586 = vmatprep.subr.mxu0 0.0
      %587 = vmatpush1.msra.mxu0 %v502
      %588 = vmatprep.subr.mxu0 0.0
      %589 = vmatpush1.msra.mxu0 %v503
      %590 = vmatprep.subr.mxu0 0.0
      %591 = vmatpush1.msra.mxu0 %v504
      %592 = vmatprep.subr.mxu0 0.0
      %593 = vmatpush1.msra.mxu0 %v505
      %594 = vmatprep.subr.mxu0 0.0
      %595 = vmatpush1.msra.mxu0 %v506
      %596 = vmatprep.subr.mxu0 0.0
      %597 = vmatpush1.msra.mxu0 %v507
      %598 = vmatprep.subr.mxu0 0.0
      %599 = vmatpush1.msra.mxu0 %v508
      %600 = vmatprep.subr.mxu0 0.0
      %601 = vmatpush1.msra.mxu0 %v509
      %602 = vmatprep.subr.mxu0 0.0
      %603 = vmatpush1.msra.mxu0 %v510
      %604 = vmatprep.subr.mxu0 0.0
      %605 = vmatpush1.msra.mxu0 %v511
      %606 = vmatprep.subr.mxu0 0.0
      %607 = vmatpush1.msra.mxu0 %v512
      %608 = vmatprep.subr.mxu0 0.0
      %609 = vmatpush1.msra.mxu0 %v513
      %610 = vmatprep.subr.mxu0 0.0
      %611 = vmatpush1.msra.mxu0 %v514
      %612 = vmatprep.subr.mxu0 0.0
      %613 = vmatpush1.msra.mxu0 %v515
      %614 = vmatprep.subr.mxu0 0.0
      %615 = vmatpush1.msra.mxu0 %v516
      %616 = vmatprep.subr.mxu0 0.0
      %617 = vmatpush1.msra.mxu0 %v517
      %618 = vmatprep.subr.mxu0 0.0
      %619 = vmatpush1.msra.mxu0 %v518
      %620 = vmatprep.subr.mxu0 0.0
      %621 = vmatpush1.msra.mxu0 %v519
      %622 = vmatprep.subr.mxu0 0.0
      %623 = vmatpush1.msra.mxu0 %v520
      %624 = vmatprep.mubr.f32.mxu0 %v486
      %625 = vmatmul.mubr.f32.gmra.mrb[0].mxu0 %v485
      %v626 = vpop.f32.mrb[0].mxu0
      %v627 = vadd.f32 %v558, %v626
      %v628 = vpop.f32.mrb[0].mxu0
      %629 = vdwg.mxu0
      %630 = vmatprep.subr.mxu0 0.0
      %631 = vmatpush1.msra.mxu0 %v521
      %632 = vmatprep.subr.mxu0 0.0
      %633 = vmatpush1.msra.mxu0 %v522
      %634 = vmatprep.subr.mxu0 0.0
      %635 = vmatpush1.msra.mxu0 %v523
      %636 = vmatprep.subr.mxu0 0.0
      %637 = vmatpush1.msra.mxu0 %v524
      %638 = vmatprep.subr.mxu0 0.0
      %639 = vmatpush1.msra.mxu0 %v525
      %640 = vmatprep.subr.mxu0 0.0
      %641 = vmatpush1.msra.mxu0 %v526
      %642 = vmatprep.subr.mxu0 0.0
      %643 = vmatpush1.msra.mxu0 %v527
      %644 = vmatprep.subr.mxu0 0.0
      %645 = vmatpush1.msra.mxu0 %v528
      %646 = vmatprep.subr.mxu0 0.0
      %647 = vmatpush1.msra.mxu0 %v529
      %648 = vmatprep.subr.mxu0 0.0
      %649 = vmatpush1.msra.mxu0 %v530
      %650 = vmatprep.subr.mxu0 0.0
      %651 = vmatpush1.msra.mxu0 %v531
      %652 = vmatprep.subr.mxu0 0.0
      %653 = vmatpush1.msra.mxu0 %v532
      %654 = vmatprep.subr.mxu0 0.0
      %655 = vmatpush1.msra.mxu0 %v533
      %656 = vmatprep.subr.mxu0 0.0
      %657 = vmatpush1.msra.mxu0 %v534
      %658 = vmatprep.subr.mxu0 0.0
      %659 = vmatpush1.msra.mxu0 %v535
      %660 = vmatprep.subr.mxu0 0.0
      %661 = vmatpush1.msra.mxu0 %v536
      %662 = vmatprep.subr.mxu0 0.0
      %663 = vmatpush1.msra.mxu0 %v537
      %664 = vmatprep.subr.mxu0 0.0
      %665 = vmatpush1.msra.mxu0 %v538
      %666 = vmatprep.subr.mxu0 0.0
      %667 = vmatpush1.msra.mxu0 %v539
      %668 = vmatprep.subr.mxu0 0.0
      %669 = vmatpush1.msra.mxu0 %v540
      %670 = vmatprep.subr.mxu0 0.0
      %671 = vmatpush1.msra.mxu0 %v541
      %672 = vmatprep.subr.mxu0 0.0
      %673 = vmatpush1.msra.mxu0 %v542
      %674 = vmatprep.subr.mxu0 0.0
      %675 = vmatpush1.msra.mxu0 %v543
      %676 = vmatprep.subr.mxu0 0.0
      %677 = vmatpush1.msra.mxu0 %v544
      %678 = vmatprep.subr.mxu0 0.0
      %679 = vmatpush1.msra.mxu0 %v545
      %680 = vmatprep.subr.mxu0 0.0
      %681 = vmatpush1.msra.mxu0 %v546
      %682 = vmatprep.subr.mxu0 0.0
      %683 = vmatpush1.msra.mxu0 %v547
      %684 = vmatprep.subr.mxu0 0.0
      %685 = vmatpush1.msra.mxu0 %v548
      %686 = vmatprep.subr.mxu0 0.0
      %687 = vmatpush1.msra.mxu0 %v549
      %688 = vmatprep.subr.mxu0 0.0
      %689 = vmatpush1.msra.mxu0 %v550
      %690 = vmatprep.subr.mxu0 0.0
      %691 = vmatpush1.msra.mxu0 %v551
      %692 = vmatprep.subr.mxu0 0.0
      %693 = vmatpush1.msra.mxu0 %v552
      %694 = vmatprep.mubr.f32.mxu0 %v488
      %695 = vmatmul.mubr.f32.gmra.mrb[0].mxu0 %v487
      %v696 = vpop.f32.mrb[0].mxu0
      %v697 = vadd.f32 %v627, %v696
      %v698 = vpop.f32.mrb[0].mxu0
      %699 = vdwg.mxu0
      %700 = vmax.xlane.f32.xlu0 %v697
      %v701 = vpop.xlane.xlu0 %700
      %v702 = vsub.f32 %v697, %v701
      %v703 = vmul.f32 %v702, 1.442695
      %v704 = vpow.pop %v703
      %705 = vadd.xlane.f32.xlu0 %v704
      %v706 = vpop.xlane.xlu0 %705
      %v707 = vrcp.pop %v706
      %v708 = vmul.f32 1.0, %v707
      %v709 = vmul.f32 %v704, %v708
      %710 = vst [vmem:[#allocation8] sm:$0xff] %v709
    $region29: #{tpu_custom_call.1} parent=1 // pred_fallthru
      _
    // Predicated region
    $region30: #{tpu_custom_call.1} parent=1 // pred_check
      _
    $region31: #{tpu_custom_call.1} parent=1 // pred_check_branch
      %712 = sbr.rel (0) target = $region33
    $region32: #{tpu_custom_call.1} parent=1 // pred_region
      %s714 = ssub.s32 128, 128
      %715 = vsyncadd [#allocation5], %s714
      %s717 = sshll.u32 [#allocation8], 4
      %s718 = int_to_ptr.vmem [resolvable:$true] %s717
      %720 = dma.vmem_to_hbm [thread:$0]  %s718, 128, %s3, [#allocation5]
    $region33: #{tpu_custom_call.1} parent=1 // pred_fallthru
      _
    // Predicated region
    $region34: #{tpu_custom_call.1} parent=1 // pred_check
      _
    $region35: #{tpu_custom_call.1} parent=1 // pred_check_branch
      %722 = sbr.rel (0) target = $region37
    $region36: #{tpu_custom_call.1} parent=1 // pred_region
      %723 = dma.done [#allocation5], 128
    $region37: #{tpu_custom_call.1} parent=1 // pred_fallthru
      _
    %724 = vsyncpa [#allocation4], 1
    %725 = vsyncpa [#allocation7], 1
    %726 = vsyncpa [#allocation5], 1

</llo_original>
